<compile_context>
chip_gen: v6e
topology: v6e:2x2x1
jax: 0.10.0
libtpu: 0.0.40
codegen_flags: <defaults>
</compile_context>

<pallas_src>
import functools
import math

import jax
import jax.numpy as jnp
from jax.experimental import pallas as pl
from jax.experimental.pallas import tpu as pltpu

_HALF_LOG_2PI = 0.5 * math.log(2.0 * math.pi)

# Packed per-dim parameter row indices (rows of the (8, D) params array).
_MU_Q, _SIG_Q, _MU_P, _INV_SIG_P, _LOG_SIG_P, _LOG_SIG_Q, _INV_SIG_Q = range(7)
_NPARAM_ROWS = 8  # padded to 8 for clean (8, 128) sublane tiling


def _vb_encoder_kernel(params_ref, eps_ref, logp_ref, logq_ref, samples_ref,
                       *, min_clamp, max_clamp):
    # (1, td) broadcast rows — all precomputed in the wrapper, no log/divide here.
    mu_q = params_ref[_MU_Q:_MU_Q + 1, :]
    sig_q = params_ref[_SIG_Q:_SIG_Q + 1, :]
    mu_p = params_ref[_MU_P:_MU_P + 1, :]
    inv_sig_p = params_ref[_INV_SIG_P:_INV_SIG_P + 1, :]
    log_sig_p = params_ref[_LOG_SIG_P:_LOG_SIG_P + 1, :]
    log_sig_q = params_ref[_LOG_SIG_Q:_LOG_SIG_Q + 1, :]

    eps = eps_ref[...]  # (ts, td)

    # --- rsample (reparameterization trick) ---
    samples = mu_q + sig_q * eps

    # --- min_max_clamp (compile-time specialization on Python constants) ---
    clamped = False
    if min_clamp is not None:
        samples = jnp.maximum(samples, jnp.float32(min_clamp))
        clamped = True
    if max_clamp is not None:
        samples = jnp.minimum(samples, jnp.float32(max_clamp))
        clamped = True
    samples_ref[...] = samples

    # --- Normal log_prob (matches torch.distributions.Normal) ---
    zp = (samples - mu_p) * inv_sig_p
    logp_ref[...] = -0.5 * zp * zp - log_sig_p - _HALF_LOG_2PI

    if clamped:
        inv_sig_q = params_ref[_INV_SIG_Q:_INV_SIG_Q + 1, :]
        zq = (samples - mu_q) * inv_sig_q
    else:
        # (samples - mu_q) / sig_q == eps exactly when no clamping occurred.
        zq = eps
    logq_ref[...] = -0.5 * zq * zq - log_sig_q - _HALF_LOG_2PI


def _largest_tile(n, align, cap):
    """Largest multiple of `align` that divides n and is <= cap.

    `n` is always a multiple of `align` here (inputs are padded), so this
    always terminates at a divisor >= align and never blows past `cap`."""
    if n <= cap:
        return n
    t = cap - (cap % align)
    while t >= align:
        if n % t == 0:
            return t
        t -= align
    return align


def _vmem_budget_bytes():
    """Generation-aware double-buffered working-set budget."""
    try:
        cap = int(pltpu.get_tpu_info().vmem_capacity_bytes)
    except Exception:
        cap = 64 << 20  # conservative default (v7x-sized)
    if cap >= (100 << 20):   # v5e / v6e: 128 MiB physical per TC
        return 48 << 20
    if cap >= (48 << 20):    # v7x: 64 MiB physical per TC
        return 20 << 20
    return 12 << 20


def _choose_tiles(S_pad, D_pad, budget_bytes, max_td=2048):
    """Pick (ts, td) for padded dims (S_pad % 8 == 0, D_pad % 128 == 0)."""
    td = _largest_tile(D_pad, 128, min(max_td, D_pad))
    # Per grid step, double buffered: eps input + 3 outputs, all f32
    #   -> ~ 4 streams * 2 buffers * 4 B = 32 B per (ts, td) element.
    max_elems = budget_bytes // 32
    max_ts = max(8, (max_elems // td) // 8 * 8)
    ts = _largest_tile(S_pad, 8, max_ts)
    return ts, td


def vb_encoder_forward(mu_q, sig_q, mu_p, sig_p, eps,
                       min_clamp=False, max_clamp=False, ts=None, td=None):
    """Pallas implementation of VB_Encoder.forward (Normal q / Normal p).

    mu_q, sig_q, mu_p, sig_p: (D,) float32 distribution parameters.
    eps: (S, D) float32 standard-normal noise (glue: drawn with jax.random).
    Returns (logp, logq, kl, samples) = ((S,D),(S,D),(D,),(S,D)).
    """
    S, D = eps.shape
    mu_q = mu_q.astype(jnp.float32)
    sig_q = sig_q.astype(jnp.float32)
    mu_p = mu_p.astype(jnp.float32)
    sig_p = sig_p.astype(jnp.float32)
    eps = eps.astype(jnp.float32)

    # --- analytical KL(q || p) for diagonal Normals: tiny, S-independent ->
    #     computed here in plain jnp so the kernel grid has no reduction axis.
    var_ratio = (sig_q / sig_p) ** 2
    t1 = ((mu_q - mu_p) / sig_p) ** 2
    kl = 0.5 * (var_ratio + t1 - 1.0 - jnp.log(var_ratio))
    # TODO(synk): Monte-Carlo KL fallback (when kl_divergence is undefined) is
    # not needed for the Normal/Normal case implemented here.

    # --- pad to lane/sublane-aligned shapes (sigma padded with 1 -> safe logs)
    S_pad = -(-S // 8) * 8
    D_pad = -(-D // 128) * 128
    dpad = D_pad - D
    if dpad:
        mu_q_p = jnp.pad(mu_q, (0, dpad))
        sig_q_p = jnp.pad(sig_q, (0, dpad), constant_values=1.0)
        mu_p_p = jnp.pad(mu_p, (0, dpad))
        sig_p_p = jnp.pad(sig_p, (0, dpad), constant_values=1.0)
    else:
        mu_q_p, sig_q_p, mu_p_p, sig_p_p = mu_q, sig_q, mu_p, sig_p
    eps_p = jnp.pad(eps, ((0, S_pad - S), (0, dpad))) if (dpad or S_pad != S) else eps

    # --- hoisted per-dim precomputation, packed into one (8, D_pad) array ---
    params = jnp.zeros((_NPARAM_ROWS, D_pad), jnp.float32)
    params = params.at[_MU_Q].set(mu_q_p)
    params = params.at[_SIG_Q].set(sig_q_p)
    params = params.at[_MU_P].set(mu_p_p)
    params = params.at[_INV_SIG_P].set(1.0 / sig_p_p)
    params = params.at[_LOG_SIG_P].set(jnp.log(sig_p_p))
    params = params.at[_LOG_SIG_Q].set(jnp.log(sig_q_p))
    params = params.at[_INV_SIG_Q].set(1.0 / sig_q_p)

    budget = _vmem_budget_bytes()
    auto_ts, auto_td = _choose_tiles(S_pad, D_pad, budget)
    ts = auto_ts if ts is None else ts
    td = auto_td if td is None else td
    assert S_pad % ts == 0 and D_pad % td == 0
    assert ts % 8 == 0 and td % 128 == 0

    kernel = functools.partial(
        _vb_encoder_kernel,
        min_clamp=None if min_clamp is False else float(min_clamp),
        max_clamp=None if max_clamp is False else float(max_clamp),
    )

    param_spec = pl.BlockSpec((_NPARAM_ROWS, td), lambda j, i: (0, j))
    sd_spec = pl.BlockSpec((ts, td), lambda j, i: (i, j))

    logp, logq, samples = pl.pallas_call(
        kernel,
        grid=(D_pad // td, S_pad // ts),
        in_specs=[param_spec, sd_spec],
        out_specs=(sd_spec, sd_spec, sd_spec),
        out_shape=(
            jax.ShapeDtypeStruct((S_pad, D_pad), jnp.float32),   # logp
            jax.ShapeDtypeStruct((S_pad, D_pad), jnp.float32),   # logq
            jax.ShapeDtypeStruct((S_pad, D_pad), jnp.float32),   # samples
        ),
        compiler_params=pltpu.CompilerParams(
            dimension_semantics=("parallel", "parallel"),
            vmem_limit_bytes=budget + (16 << 20)),
    )(params, eps_p)

    if S_pad != S or D_pad != D:
        logp = logp[:S, :D]
        logq = logq[:S, :D]
        samples = samples[:S, :D]
    return logp, logq, kl, samples


def _reference(mu_q, sig_q, mu_p, sig_p, eps, min_clamp, max_clamp):
    samples = mu_q[None, :] + sig_q[None, :] * eps
    if min_clamp is not False:
        samples = jnp.maximum(samples, min_clamp)
    if max_clamp is not False:
        samples = jnp.minimum(samples, max_clamp)

    def lp(x, mu, sigma):
        z = (x - mu) / sigma
        return -0.5 * z * z - jnp.log(sigma) - _HALF_LOG_2PI

    logp = lp(samples, mu_p[None, :], sig_p[None, :])
    logq = lp(samples, mu_q[None, :], sig_q[None, :])
    vr = (sig_q / sig_p) ** 2
    t1 = ((mu_q - mu_p) / sig_p) ** 2
    kl = 0.5 * (vr + t1 - 1.0 - jnp.log(vr))
    return logp, logq, kl, samples


def _check(out, ref, S, D):
    logp, logq, kl, samples = out
    r_logp, r_logq, r_kl, r_samples = ref
    assert logp.shape == (S, D) and logq.shape == (S, D)
    assert kl.shape == (D,) and samples.shape == (S, D)
    assert jnp.allclose(samples, r_samples, atol=1e-5, rtol=1e-5)
    assert jnp.allclose(logp, r_logp, atol=1e-4, rtol=1e-4)
    assert jnp.allclose(logq, r_logq, atol=1e-4, rtol=1e-4)
    assert jnp.allclose(kl, r_kl, atol=1e-4, rtol=1e-4)


if __name__ == "__main__":
    key = jax.random.PRNGKey(0)
    k_mu, k_rho, k_eps = jax.random.split(key, 3)

    # sample_size=8, latent dim=256 (single grid step after tiling)
    S, D = 8, 256
    mu_q = 0.1 * jax.random.normal(k_mu, (D,), dtype=jnp.float32)
    sig_q = jax.nn.softplus(jax.random.normal(k_rho, (D,), dtype=jnp.float32)) + 1e-3
    mu_p = jnp.zeros((D,), dtype=jnp.float32)      # standard-normal prior
    sig_p = jnp.ones((D,), dtype=jnp.float32)
    eps = jax.random.normal(k_eps, (S, D), dtype=jnp.float32)

    min_clamp, max_clamp = -3.0, 3.0

    # Clamped configuration.
    out = vb_encoder_forward(mu_q, sig_q, mu_p, sig_p, eps,
                             min_clamp=min_clamp, max_clamp=max_clamp)
    jax.block_until_ready(out)
    _check(out, _reference(mu_q, sig_q, mu_p, sig_p, eps, min_clamp, max_clamp), S, D)

    # Unclamped configuration (exercises the eps fast path for logq).
    out2 = vb_encoder_forward(mu_q, sig_q, mu_p, sig_p, eps)
    jax.block_until_ready(out2)
    _check(out2, _reference(mu_q, sig_q, mu_p, sig_p, eps, False, False), S, D)

    # Non-aligned shape (exercises the padding / tail handling path).
    S3, D3 = 10, 200
    k_mu3, k_rho3, k_eps3 = jax.random.split(jax.random.PRNGKey(1), 3)
    mu_q3 = 0.1 * jax.random.normal(k_mu3, (D3,), dtype=jnp.float32)
    sig_q3 = jax.nn.softplus(jax.random.normal(k_rho3, (D3,), dtype=jnp.float32)) + 1e-3
    mu_p3 = jnp.zeros((D3,), dtype=jnp.float32)
    sig_p3 = jnp.ones((D3,), dtype=jnp.float32)
    eps3 = jax.random.normal(k_eps3, (S3, D3), dtype=jnp.float32)
    out3 = vb_encoder_forward(mu_q3, sig_q3, mu_p3, sig_p3, eps3,
                              min_clamp=min_clamp, max_clamp=max_clamp)
    jax.block_until_ready(out3)
    _check(out3, _reference(mu_q3, sig_q3, mu_p3, sig_p3, eps3, min_clamp, max_clamp),
           S3, D3)

    print("KERNEL_OK")
</pallas_src>

<mosaic_0001>
module attributes {stable_mosaic.version = 11 : i64} {
  func.func @_vb_encoder_kernel(%arg0: i32, %arg1: i32, %arg2: memref<8x256xf32, #tpu.memory_space<vmem>>, %arg3: memref<8x256xf32, #tpu.memory_space<vmem>>, %arg4: memref<8x256xf32, #tpu.memory_space<vmem>>, %arg5: memref<8x256xf32, #tpu.memory_space<vmem>>, %arg6: memref<8x256xf32, #tpu.memory_space<vmem>>) attributes {dimension_semantics = [#tpu.dimension_semantics<parallel>, #tpu.dimension_semantics<parallel>], iteration_bounds = array<i64: 1, 1>, scalar_prefetch = 0 : i64, scratch_operands = 0 : i64, tpu.core_type = #tpu.core_type<tc>, window_params = [{transform_indices = @transform_0, window_bounds = array<i64: 8, 256>}, {transform_indices = @transform_1, window_bounds = array<i64: 8, 256>}, {transform_indices = @transform_2, window_bounds = array<i64: 8, 256>}, {transform_indices = @transform_3, window_bounds = array<i64: 8, 256>}, {transform_indices = @transform_4, window_bounds = array<i64: 8, 256>}]} {
    %c0 = arith.constant 0 : index
    %c0_0 = arith.constant 0 : index
    %0 = vector.load %arg2[%c0, %c0_0] : memref<8x256xf32, #tpu.memory_space<vmem>>, vector<1x256xf32>
    %c1 = arith.constant 1 : index
    %c0_1 = arith.constant 0 : index
    %1 = vector.load %arg2[%c1, %c0_1] : memref<8x256xf32, #tpu.memory_space<vmem>>, vector<1x256xf32>
    %c2 = arith.constant 2 : index
    %c0_2 = arith.constant 0 : index
    %2 = vector.load %arg2[%c2, %c0_2] : memref<8x256xf32, #tpu.memory_space<vmem>>, vector<1x256xf32>
    %c3 = arith.constant 3 : index
    %c0_3 = arith.constant 0 : index
    %3 = vector.load %arg2[%c3, %c0_3] : memref<8x256xf32, #tpu.memory_space<vmem>>, vector<1x256xf32>
    %c4 = arith.constant 4 : index
    %c0_4 = arith.constant 0 : index
    %4 = vector.load %arg2[%c4, %c0_4] : memref<8x256xf32, #tpu.memory_space<vmem>>, vector<1x256xf32>
    %c5 = arith.constant 5 : index
    %c0_5 = arith.constant 0 : index
    %5 = vector.load %arg2[%c5, %c0_5] : memref<8x256xf32, #tpu.memory_space<vmem>>, vector<1x256xf32>
    %c0_6 = arith.constant 0 : index
    %c0_7 = arith.constant 0 : index
    %6 = vector.load %arg3[%c0_6, %c0_7] : memref<8x256xf32, #tpu.memory_space<vmem>>, vector<8x256xf32>
    %7 = vector.broadcast %1 : vector<1x256xf32> to vector<8x256xf32>
    %8 = arith.mulf %7, %6 : vector<8x256xf32>
    %9 = vector.broadcast %0 : vector<1x256xf32> to vector<8x256xf32>
    %10 = arith.addf %9, %8 : vector<8x256xf32>
    %cst = arith.constant -3.000000e+00 : f32
    %11 = vector.broadcast %cst : f32 to vector<8x256xf32>
    %12 = arith.maximumf %10, %11 : vector<8x256xf32>
    %cst_8 = arith.constant 3.000000e+00 : f32
    %13 = vector.broadcast %cst_8 : f32 to vector<8x256xf32>
    %14 = arith.minimumf %12, %13 : vector<8x256xf32>
    %c0_9 = arith.constant 0 : index
    %c0_10 = arith.constant 0 : index
    %15 = vector.load %arg6[%c0_9, %c0_10] : memref<8x256xf32, #tpu.memory_space<vmem>>, vector<8x256xf32>
    tpu.vector_store %arg6[%c0_9, %c0_10], %14 {strides = array<i32>} : memref<8x256xf32, #tpu.memory_space<vmem>>, vector<8x256xf32>,
    %16 = vector.broadcast %2 : vector<1x256xf32> to vector<8x256xf32>
    %17 = arith.subf %14, %16 : vector<8x256xf32>
    %18 = vector.broadcast %3 : vector<1x256xf32> to vector<8x256xf32>
    %19 = arith.mulf %17, %18 : vector<8x256xf32>
    %cst_11 = arith.constant -5.000000e-01 : f32
    %20 = vector.broadcast %cst_11 : f32 to vector<8x256xf32>
    %21 = arith.mulf %20, %19 : vector<8x256xf32>
    %22 = arith.mulf %21, %19 : vector<8x256xf32>
    %23 = vector.broadcast %4 : vector<1x256xf32> to vector<8x256xf32>
    %24 = arith.subf %22, %23 : vector<8x256xf32>
    %cst_12 = arith.constant 0.918938517 : f32
    %25 = vector.broadcast %cst_12 : f32 to vector<8x256xf32>
    %26 = arith.subf %24, %25 : vector<8x256xf32>
    %c0_13 = arith.constant 0 : index
    %c0_14 = arith.constant 0 : index
    %27 = vector.load %arg4[%c0_13, %c0_14] : memref<8x256xf32, #tpu.memory_space<vmem>>, vector<8x256xf32>
    tpu.vector_store %arg4[%c0_13, %c0_14], %26 {strides = array<i32>} : memref<8x256xf32, #tpu.memory_space<vmem>>, vector<8x256xf32>,
    %c6 = arith.constant 6 : index
    %c0_15 = arith.constant 0 : index
    %28 = vector.load %arg2[%c6, %c0_15] : memref<8x256xf32, #tpu.memory_space<vmem>>, vector<1x256xf32>
    %29 = vector.broadcast %0 : vector<1x256xf32> to vector<8x256xf32>
    %30 = arith.subf %14, %29 : vector<8x256xf32>
    %31 = vector.broadcast %28 : vector<1x256xf32> to vector<8x256xf32>
    %32 = arith.mulf %30, %31 : vector<8x256xf32>
    %cst_16 = arith.constant -5.000000e-01 : f32
    %33 = vector.broadcast %cst_16 : f32 to vector<8x256xf32>
    %34 = arith.mulf %33, %32 : vector<8x256xf32>
    %35 = arith.mulf %34, %32 : vector<8x256xf32>
    %36 = vector.broadcast %5 : vector<1x256xf32> to vector<8x256xf32>
    %37 = arith.subf %35, %36 : vector<8x256xf32>
    %cst_17 = arith.constant 0.918938517 : f32
    %38 = vector.broadcast %cst_17 : f32 to vector<8x256xf32>
    %39 = arith.subf %37, %38 : vector<8x256xf32>
    %c0_18 = arith.constant 0 : index
    %c0_19 = arith.constant 0 : index
    %40 = vector.load %arg5[%c0_18, %c0_19] : memref<8x256xf32, #tpu.memory_space<vmem>>, vector<8x256xf32>
    tpu.vector_store %arg5[%c0_18, %c0_19], %39 {strides = array<i32>} : memref<8x256xf32, #tpu.memory_space<vmem>>, vector<8x256xf32>,
    return
  }
  func.func @transform_0(%arg0: i32, %arg1: i32) -> (i32, i32) {
    %c0_i32 = arith.constant 0 : i32
    %c0_i32_0 = arith.constant 0 : i32
    return %c0_i32, %arg0 : i32, i32
  }
  func.func @transform_1(%arg0: i32, %arg1: i32) -> (i32, i32) {
    %c0_i32 = arith.constant 0 : i32
    return %arg1, %arg0 : i32, i32
  }
  func.func @transform_2(%arg0: i32, %arg1: i32) -> (i32, i32) {
    %c0_i32 = arith.constant 0 : i32
    return %arg1, %arg0 : i32, i32
  }
  func.func @transform_3(%arg0: i32, %arg1: i32) -> (i32, i32) {
    %c0_i32 = arith.constant 0 : i32
    return %arg1, %arg0 : i32, i32
  }
  func.func @transform_4(%arg0: i32, %arg1: i32) -> (i32, i32) {
    %c0_i32 = arith.constant 0 : i32
    return %arg1, %arg0 : i32, i32
  }
}

</mosaic_0001>

<llo_original>
// kernel: tpu_custom_call.1
$region0: #{tpu_custom_call.1}
  #allocation0 [shape = 'u32[]', space=smem, size = 0x4, offset = 0x4, fixed_abs, tag = 'smem constant byte address 0x4 - core index']
  #allocation1 [shape = 'u32[144,128]{1,0:T(1,128)}', space=vmem, size = 0x12000, scoped, tag = 'internal scratch']
  %s0 = inlined_call_operand.hbm [shape: f32[8,256], index: 0, kind: input, shape index: {}]
  %s1 = inlined_call_operand.hbm [shape: f32[8,256], index: 1, kind: input, shape index: {}]
  %s2 = inlined_call_operand.hbm [shape: f32[8,256], index: 2, kind: output, shape index: {0}]
  %s3 = inlined_call_operand.hbm [shape: f32[8,256], index: 3, kind: output, shape index: {1}]
  %s4 = inlined_call_operand.hbm [shape: f32[8,256], index: 4, kind: output, shape index: {2}]
  %5 = xla_tuple %s2, %s3, %s4
  %s6 = sld [smem:[#allocation0]]
  $region42: #{tpu_custom_call.1} parent=0
    _
  %s8 = ssub.s32 1, %s6
  %s9 = scalar_select 0, %s8, %s6
  $region1: #{tpu_custom_call.1} parent=0
    #allocation2 [shape = 'u8[8192]{0}', space=vmem, size = 0x2000, scoped, tag = 'input window, operand 0, single buffered']
    #allocation3 [shape = 's32[1]{0}', space=sflag, size = 0x4, scoped, tag = 'scoped memory for tpu_custom_call.1']
    #allocation4 [shape = 's32[1]{0}', space=sflag, size = 0x4, scoped, tag = 'scoped memory for tpu_custom_call.1']
    #allocation5 [shape = 'u8[8192]{0}', space=vmem, size = 0x2000, scoped, tag = 'input window, operand 1, single buffered']
    #allocation6 [shape = 's32[1]{0}', space=sflag, size = 0x4, scoped, tag = 'scoped memory for tpu_custom_call.1']
    #allocation7 [shape = 'u8[8192]{0}', space=vmem, size = 0x2000, scoped, tag = 'output window, operand 0, single buffered']
    #allocation8 [shape = 'u8[8192]{0}', space=vmem, size = 0x2000, scoped, tag = 'output window, operand 1, single buffered']
    #allocation9 [shape = 's32[1]{0}', space=sflag, size = 0x4, scoped, tag = 'scoped memory for tpu_custom_call.1']
    #allocation10 [shape = 'u8[8192]{0}', space=vmem, size = 0x2000, scoped, tag = 'output window, operand 2, single buffered']
    %10 = vsyncpa [#allocation3], 0
    %11 = vsyncpa [#allocation6], 0
    %12 = vsyncpa [#allocation4], 0
    %13 = vsyncpa [#allocation9], 0
    // Predicated region
    $region2: #{tpu_custom_call.1} parent=1 // pred_check
      _
    $region3: #{tpu_custom_call.1} parent=1 // pred_check_branch
      %15 = sbr.rel (0) target = $region5
    $region4: #{tpu_custom_call.1} parent=1 // pred_region
      %s17 = ssub.s32 256, 256
      %18 = vsyncadd [#allocation3], %s17
      %s20 = sshll.u32 [#allocation2], 4
      %s21 = int_to_ptr.vmem [resolvable:$true] %s20
      %23 = dma.hbm_to_vmem [thread:$0]  %s0, 256, %s21, [#allocation3]
    $region5: #{tpu_custom_call.1} parent=1 // pred_fallthru
      _
    // Predicated region
    $region6: #{tpu_custom_call.1} parent=1 // pred_check
      _
    $region7: #{tpu_custom_call.1} parent=1 // pred_check_branch
      %25 = sbr.rel (0) target = $region9
    $region8: #{tpu_custom_call.1} parent=1 // pred_region
      %s27 = ssub.s32 256, 256
      %28 = vsyncadd [#allocation6], %s27
      %s30 = sshll.u32 [#allocation5], 4
      %s31 = int_to_ptr.vmem [resolvable:$true] %s30
      %33 = dma.hbm_to_vmem [thread:$0]  %s1, 256, %s31, [#allocation6]
    $region9: #{tpu_custom_call.1} parent=1 // pred_fallthru
      _
    // Predicated region
    $region10: #{tpu_custom_call.1} parent=1 // pred_check
      _
    $region11: #{tpu_custom_call.1} parent=1 // pred_check_branch
      %35 = sbr.rel (0) target = $region13
    $region12: #{tpu_custom_call.1} parent=1 // pred_region
      %36 = dma.done [#allocation3], 256
    $region13: #{tpu_custom_call.1} parent=1 // pred_fallthru
      _
    // Predicated region
    $region14: #{tpu_custom_call.1} parent=1 // pred_check
      _
    $region15: #{tpu_custom_call.1} parent=1 // pred_check_branch
      %38 = sbr.rel (0) target = $region17
    $region16: #{tpu_custom_call.1} parent=1 // pred_region
      %39 = dma.done [#allocation6], 256
    $region17: #{tpu_custom_call.1} parent=1 // pred_fallthru
      _
    %v40 = vld [vmem:[#allocation2] ss:$8 sm:$0x3]
    %s41 = scalar_lea.vmem [#allocation2], 1
    %v42 = vld [vmem:[%s41] ss:$8 sm:$0x3]
    %s43 = scalar_lea.vmem [#allocation2], 2
    %v44 = vld [vmem:[%s43] ss:$8 sm:$0x3]
    %s45 = scalar_lea.vmem [#allocation2], 3
    %v46 = vld [vmem:[%s45] ss:$8 sm:$0x3]
    %s47 = scalar_lea.vmem [#allocation2], 4
    %v48 = vld [vmem:[%s47] ss:$8 sm:$0x3]
    %s49 = scalar_lea.vmem [#allocation2], 5
    %v50 = vld [vmem:[%s49] ss:$8 sm:$0x3]
    %v51 = vld [vmem:[#allocation5] sm:$0xff]
    %v52 = vld [vmem:[#allocation5 + $0x8] sm:$0xff]
    %v54 = vlaneseq
    %v55 = vshrl.u32 %v54, 7
    %v56 = vsub.s32 0, %v55
    %v57 = vrot.slane %v42, %v56
    %v58 = vlaneseq
    %v59 = vshrl.u32 %v58, 7
    %v60 = vsub.s32 1, %v59
    %v61 = vrot.slane %v42, %v60
    %v64 = vmul.f32 %v57, %v51
    %v65 = vmul.f32 %v61, %v52
    %v67 = vlaneseq
    %v68 = vshrl.u32 %v67, 7
    %v69 = vsub.s32 0, %v68
    %v70 = vrot.slane %v40, %v69
    %v71 = vlaneseq
    %v72 = vshrl.u32 %v71, 7
    %v73 = vsub.s32 1, %v72
    %v74 = vrot.slane %v40, %v73
    %v77 = vadd.f32 %v70, %v64
    %v78 = vadd.f32 %v74, %v65
    %v79 = vmax.f32 %v77, -3.0
    %v80 = vmax.f32 %v78, -3.0
    %v81 = vmin.f32 %v79, 3.0
    %v82 = vmin.f32 %v80, 3.0
    %83 = vst [vmem:[#allocation10] sm:$0xff] %v81
    %84 = vst [vmem:[#allocation10 + $0x8] sm:$0xff] %v82
    %v86 = vlaneseq
    %v87 = vshrl.u32 %v86, 7
    %v88 = vsub.s32 0, %v87
    %v89 = vrot.slane %v44, %v88
    %v90 = vlaneseq
    %v91 = vshrl.u32 %v90, 7
    %v92 = vsub.s32 1, %v91
    %v93 = vrot.slane %v44, %v92
    %v96 = vsub.f32 %v81, %v89
    %v97 = vsub.f32 %v82, %v93
    %v99 = vlaneseq
    %v100 = vshrl.u32 %v99, 7
    %v101 = vsub.s32 0, %v100
    %v102 = vrot.slane %v46, %v101
    %v103 = vlaneseq
    %v104 = vshrl.u32 %v103, 7
    %v105 = vsub.s32 1, %v104
    %v106 = vrot.slane %v46, %v105
    %v109 = vmul.f32 %v96, %v102
    %v110 = vmul.f32 %v97, %v106
    %v111 = vmul.f32 %v109, -0.5
    %v112 = vmul.f32 %v110, -0.5
    %v113 = vmul.f32 %v111, %v109
    %v114 = vmul.f32 %v112, %v110
    %v116 = vlaneseq
    %v117 = vshrl.u32 %v116, 7
    %v118 = vsub.s32 0, %v117
    %v119 = vrot.slane %v48, %v118
    %v120 = vlaneseq
    %v121 = vshrl.u32 %v120, 7
    %v122 = vsub.s32 1, %v121
    %v123 = vrot.slane %v48, %v122
    %v126 = vsub.f32 %v113, %v119
    %v127 = vsub.f32 %v114, %v123
    %v128 = vsub.f32 %v126, 0.9189385
    %v129 = vsub.f32 %v127, 0.9189385
    %130 = vst [vmem:[#allocation7] sm:$0xff] %v128
    %131 = vst [vmem:[#allocation7 + $0x8] sm:$0xff] %v129
    %s132 = scalar_lea.vmem [#allocation2], 6
    %v133 = vld [vmem:[%s132] ss:$8 sm:$0x3]
    %v134 = vsub.f32 %v81, %v70
    %v135 = vsub.f32 %v82, %v74
    %v137 = vlaneseq
    %v138 = vshrl.u32 %v137, 7
    %v139 = vsub.s32 0, %v138
    %v140 = vrot.slane %v133, %v139
    %v141 = vlaneseq
    %v142 = vshrl.u32 %v141, 7
    %v143 = vsub.s32 1, %v142
    %v144 = vrot.slane %v133, %v143
    %v147 = vmul.f32 %v134, %v140
    %v148 = vmul.f32 %v135, %v144
    %v149 = vmul.f32 %v147, -0.5
    %v150 = vmul.f32 %v148, -0.5
    %v151 = vmul.f32 %v149, %v147
    %v152 = vmul.f32 %v150, %v148
    %v154 = vlaneseq
    %v155 = vshrl.u32 %v154, 7
    %v156 = vsub.s32 0, %v155
    %v157 = vrot.slane %v50, %v156
    %v158 = vlaneseq
    %v159 = vshrl.u32 %v158, 7
    %v160 = vsub.s32 1, %v159
    %v161 = vrot.slane %v50, %v160
    %v164 = vsub.f32 %v151, %v157
    %v165 = vsub.f32 %v152, %v161
    %v166 = vsub.f32 %v164, 0.9189385
    %v167 = vsub.f32 %v165, 0.9189385
    %168 = vst [vmem:[#allocation8] sm:$0xff] %v166
    %169 = vst [vmem:[#allocation8 + $0x8] sm:$0xff] %v167
    // Predicated region
    $region18: #{tpu_custom_call.1} parent=1 // pred_check
      _
    $region19: #{tpu_custom_call.1} parent=1 // pred_check_branch
      %171 = sbr.rel (0) target = $region21
    $region20: #{tpu_custom_call.1} parent=1 // pred_region
      %s173 = ssub.s32 256, 256
      %174 = vsyncadd [#allocation4], %s173
      %s176 = sshll.u32 [#allocation7], 4
      %s177 = int_to_ptr.vmem [resolvable:$true] %s176
      %179 = dma.vmem_to_hbm [thread:$0]  %s177, 256, %s2, [#allocation4]
    $region21: #{tpu_custom_call.1} parent=1 // pred_fallthru
      _
    // Predicated region
    $region22: #{tpu_custom_call.1} parent=1 // pred_check
      _
    $region23: #{tpu_custom_call.1} parent=1 // pred_check_branch
      %181 = sbr.rel (0) target = $region25
    $region24: #{tpu_custom_call.1} parent=1 // pred_region
      %s183 = ssub.s32 256, 256
      %184 = vsyncadd [#allocation9], %s183
      %s186 = sshll.u32 [#allocation8], 4
      %s187 = int_to_ptr.vmem [resolvable:$true] %s186
      %189 = dma.vmem_to_hbm [thread:$0]  %s187, 256, %s3, [#allocation9]
    $region25: #{tpu_custom_call.1} parent=1 // pred_fallthru
      _
    // Predicated region
    $region26: #{tpu_custom_call.1} parent=1 // pred_check
      _
    $region27: #{tpu_custom_call.1} parent=1 // pred_check_branch
      %191 = sbr.rel (0) target = $region29
    $region28: #{tpu_custom_call.1} parent=1 // pred_region
      %s193 = ssub.s32 256, 256
      %194 = vsyncadd [#allocation9], %s193
      %s196 = sshll.u32 [#allocation10], 4
      %s197 = int_to_ptr.vmem [resolvable:$true] %s196
      %199 = dma.vmem_to_hbm [thread:$0]  %s197, 256, %s4, [#allocation9]
    $region29: #{tpu_custom_call.1} parent=1 // pred_fallthru
      _
    // Predicated region
    $region30: #{tpu_custom_call.1} parent=1 // pred_check
      _
    $region31: #{tpu_custom_call.1} parent=1 // pred_check_branch
      %201 = sbr.rel (0) target = $region33
    $region32: #{tpu_custom_call.1} parent=1 // pred_region
      %202 = dma.done [#allocation4], 256
    $region33: #{tpu_custom_call.1} parent=1 // pred_fallthru
      _
    // Predicated region
    $region34: #{tpu_custom_call.1} parent=1 // pred_check
      _
    $region35: #{tpu_custom_call.1} parent=1 // pred_check_branch
      %204 = sbr.rel (0) target = $region37
    $region36: #{tpu_custom_call.1} parent=1 // pred_region
      %205 = dma.done [#allocation9], 256
    $region37: #{tpu_custom_call.1} parent=1 // pred_fallthru
      _
    // Predicated region
    $region38: #{tpu_custom_call.1} parent=1 // pred_check
      _
    $region39: #{tpu_custom_call.1} parent=1 // pred_check_branch
      %207 = sbr.rel (0) target = $region41
    $region40: #{tpu_custom_call.1} parent=1 // pred_region
      %208 = dma.done [#allocation9], 256
    $region41: #{tpu_custom_call.1} parent=1 // pred_fallthru
      _
    %209 = vsyncpa [#allocation3], 1
    %210 = vsyncpa [#allocation6], 1
    %211 = vsyncpa [#allocation4], 1
    %212 = vsyncpa [#allocation9], 1

</llo_original>
